<compile_context>
chip_gen: v6e
topology: v6e:2x2x1
jax: 0.10.0
libtpu: 0.0.40
codegen_flags: <defaults>
</compile_context>

<pallas_src>
import functools

import jax
import jax.numpy as jnp
from jax.experimental import pallas as pl
from jax.experimental.pallas import tpu as pltpu

LN_EPS = 1e-5  # nn.LayerNorm default


def _round_up(x: int, m: int) -> int:
    return (x + m - 1) // m * m


def n_hidden_for(n_features: int) -> int:
    return int(min(n_features, 90000) ** 0.5)


# ----------------------------------------------------------------------------
# Kernel
# ----------------------------------------------------------------------------
def _torchic_kernel(x_ref, w1_ref, b1_ref, g_ref, beta_ref, w2_ref, b2_ref,
                    o_ref, acc_ref, *, n_hidden: int):
    k = pl.program_id(1)

    @pl.when(k == 0)
    def _init():
        acc_ref[...] = jnp.zeros_like(acc_ref)

    # ---- Linear 1, partial product for this K chunk (MXU, f32 accumulation) ----
    # x is stored f32 in HBM; cast the tile to the streamed weight dtype here
    # (VPU work hidden under the DMA/MXU) instead of a wrapper-side HBM pass.
    acc_ref[...] += jnp.dot(x_ref[...].astype(w1_ref.dtype), w1_ref[...],
                            preferred_element_type=jnp.float32)

    @pl.when(k == pl.num_programs(1) - 1)
    def _finalize():
        # ---- bias + ReLU (f32) ----
        h = jnp.maximum(acc_ref[...] + b1_ref[...], 0.0)

        # ---- LayerNorm over the *real* hidden width n_hidden ----
        # The hidden dim is zero-padded to a multiple of 128: padded W1 columns
        # and b1 entries are zero, so padded columns of h are exactly 0 and the
        # sums below (with an explicit 1/n_hidden divisor and a mask on the
        # centered values) reproduce nn.LayerNorm statistics exactly.
        h_pad = h.shape[-1]
        inv_h = 1.0 / n_hidden
        mean = jnp.sum(h, axis=-1, keepdims=True) * inv_h
        centered = h - mean
        if h_pad != n_hidden:  # static: only emit the mask when H is padded
            lane = jax.lax.broadcasted_iota(jnp.int32, h.shape, 1)
            centered = jnp.where(lane < n_hidden, centered, 0.0)
        var = jnp.sum(centered * centered, axis=-1, keepdims=True) * inv_h
        hn = centered * jax.lax.rsqrt(var + LN_EPS) * g_ref[...] + beta_ref[...]

        # ---- Linear 2: (block_b, H_pad) @ (H_pad, C_pad) + (1, C_pad), f32 ----
        logits = jnp.dot(hn, w2_ref[...],
                         preferred_element_type=jnp.float32) + b2_ref[...]
        o_ref[...] = logits.astype(o_ref.dtype)


# ----------------------------------------------------------------------------
# One-time weight preparation (do this at init / load time, not per call)
# ----------------------------------------------------------------------------
def prepare_params(w1, b1, ln_g, ln_b, w2, b2, *, w1_dtype=jnp.bfloat16):
    """Pad weights to lane/tile-aligned shapes and cast the big streamed weight
    (W1) to the MXU streaming dtype.  Run once; the per-call forward then reads
    W1 exactly once (the kernel's own stream)."""
    F, H = w1.shape
    C = w2.shape[1]
    F_pad = _round_up(F, 128)
    H_pad = _round_up(H, 128)
    C_pad = _round_up(C, 128)

    w1_p = jnp.pad(w1, ((0, F_pad - F), (0, H_pad - H))).astype(w1_dtype)
    b1_p = jnp.pad(jnp.reshape(b1, (1, H)), ((0, 0), (0, H_pad - H))).astype(jnp.float32)
    g_p = jnp.pad(jnp.reshape(ln_g, (1, H)), ((0, 0), (0, H_pad - H))).astype(jnp.float32)
    beta_p = jnp.pad(jnp.reshape(ln_b, (1, H)), ((0, 0), (0, H_pad - H))).astype(jnp.float32)
    # W2 / b2 are tiny (<= 384 x C_pad); keep them f32 for an accurate epilogue.
    w2_p = jnp.pad(w2, ((0, H_pad - H), (0, C_pad - C))).astype(jnp.float32)
    b2_p = jnp.pad(jnp.reshape(b2, (1, C)), ((0, 0), (0, C_pad - C))).astype(jnp.float32)
    return (w1_p, b1_p, g_p, beta_p, w2_p, b2_p)


# ----------------------------------------------------------------------------
# Forward
# ----------------------------------------------------------------------------
@functools.partial(
    jax.jit,
    static_argnames=("n_hidden", "n_classes", "block_b", "block_k"),
)
def torchic_forward(x, w1_p, b1_p, g_p, beta_p, w2_p, b2_p, *,
                    n_hidden, n_classes, block_b=512, block_k=4096):
    """Fused MLP forward on pre-padded params. x: (B, F) float32 -> (B, C) float32."""
    B, F = x.shape
    F_pad, H_pad = w1_p.shape
    C_pad = w2_p.shape[1]

    # ---- tile sizes (all Python ints at trace time) ----
    block_b = min(block_b, _round_up(B, 8))
    # Largest multiple of 128 <= requested block_k that exactly divides the
    # padded F, so the K axis never has partial blocks (no ragged-tail garbage).
    fd = F_pad // 128
    kd = max(1, min(block_k, F_pad) // 128)
    while kd > 1 and fd % kd:
        kd -= 1
    block_k = kd * 128

    # ---- per-call padding: only for ragged shapes; aligned inputs are zero-copy ----
    B_pad = _round_up(B, block_b)
    if B_pad != B or F_pad != F:
        x = jnp.pad(x, ((0, B_pad - B), (0, F_pad - F)))

    grid = (B_pad // block_b, F_pad // block_k)

    # VMEM working set (double-buffered streams + f32 accumulator + constants),
    # used to size the scoped-VMEM limit.  Defaults stay v7x-safe (<= 48 MiB).
    xb = jnp.dtype(x.dtype).itemsize
    w1b = jnp.dtype(w1_p.dtype).itemsize
    vmem_bytes = (2 * block_b * block_k * xb                      # x tiles
                  + 2 * block_k * H_pad * w1b                     # W1 chunks
                  + 2 * block_b * C_pad * 4                       # output tiles
                  + block_b * H_pad * 4                           # accumulator
                  + 2 * (H_pad * C_pad * 4 + 3 * H_pad * 4 + C_pad * 4))  # consts
    vmem_limit = int(min(max(vmem_bytes + (8 << 20), 48 << 20), 100 << 20))

    kernel = functools.partial(_torchic_kernel, n_hidden=n_hidden)

    out = pl.pallas_call(
        kernel,
        out_shape=jax.ShapeDtypeStruct((B_pad, C_pad), jnp.float32),
        grid_spec=pltpu.PrefetchScalarGridSpec(
            num_scalar_prefetch=0,
            grid=grid,
            in_specs=[
                pl.BlockSpec((block_b, block_k), lambda i, k: (i, k)),   # x tile
                pl.BlockSpec((block_k, H_pad), lambda i, k: (k, 0)),     # W1 K-chunk
                pl.BlockSpec((1, H_pad), lambda i, k: (0, 0)),           # b1
                pl.BlockSpec((1, H_pad), lambda i, k: (0, 0)),           # LN gamma
                pl.BlockSpec((1, H_pad), lambda i, k: (0, 0)),           # LN beta
                pl.BlockSpec((H_pad, C_pad), lambda i, k: (0, 0)),       # W2
                pl.BlockSpec((1, C_pad), lambda i, k: (0, 0)),           # b2
            ],
            out_specs=pl.BlockSpec((block_b, C_pad), lambda i, k: (i, 0)),
            scratch_shapes=[pltpu.VMEM((block_b, H_pad), jnp.float32)],
        ),
        compiler_params=pltpu.CompilerParams(
            # Batch tiles run in parallel (megacore / v7x dual-TC); for best v7x
            # utilization pick block_b so B_pad/block_b is even.  K is a reduction.
            dimension_semantics=("parallel", "arbitrary"),
            vmem_limit_bytes=vmem_limit,
        ),
    )(x, w1_p, b1_p, g_p, beta_p, w2_p, b2_p)

    return out[:B, :n_classes]


# ----------------------------------------------------------------------------
# Parameter init (matches nn.Linear / nn.LayerNorm defaults) + pure-JAX reference
# ----------------------------------------------------------------------------
def init_params(key, n_features, n_classes):
    n_hidden = n_hidden_for(n_features)
    k1, k2, k3, k4 = jax.random.split(key, 4)

    lim1 = 1.0 / (n_features ** 0.5)
    w1 = jax.random.uniform(k1, (n_features, n_hidden), jnp.float32, -lim1, lim1)
    b1 = jax.random.uniform(k2, (1, n_hidden), jnp.float32, -lim1, lim1)

    ln_g = jnp.ones((1, n_hidden), jnp.float32)
    ln_b = jnp.zeros((1, n_hidden), jnp.float32)

    lim2 = 1.0 / (n_hidden ** 0.5)
    w2 = jax.random.uniform(k3, (n_hidden, n_classes), jnp.float32, -lim2, lim2)
    b2 = jax.random.uniform(k4, (1, n_classes), jnp.float32, -lim2, lim2)
    return w1, b1, ln_g, ln_b, w2, b2


def reference_forward(x, w1, b1, ln_g, ln_b, w2, b2):
    h = jnp.maximum(x @ w1 + b1, 0.0)
    mean = jnp.mean(h, axis=-1, keepdims=True)
    var = jnp.mean((h - mean) ** 2, axis=-1, keepdims=True)
    hn = (h - mean) * jax.lax.rsqrt(var + LN_EPS) * ln_g + ln_b
    return hn @ w2 + b2


if __name__ == "__main__":
    # Small shapes consistent with the module:
    #   n_features=512 -> n_hidden = int(sqrt(512)) = 22 (padded to 128 lanes);
    #   batch=10 (not tile-aligned) exercises batch padding;
    #   n_classes=5 (< 128) exercises the lane-dense output padding.
    batch = 10
    n_features = 512
    n_classes = 5
    n_hidden = n_hidden_for(n_features)

    key = jax.random.PRNGKey(0)
    kx, kp = jax.random.split(key)
    x = jax.random.normal(kx, (batch, n_features), dtype=jnp.float32)
    raw_params = init_params(kp, n_features, n_classes)
    ref = reference_forward(x, *raw_params)

    # f32-weight path with small tiles: exercises the multi-K-chunk accumulator
    # (grid_k = 4) and multiple batch tiles (grid_b = 2).
    params_f32 = prepare_params(*raw_params, w1_dtype=jnp.float32)
    out_f32 = torchic_forward(x, *params_f32, n_hidden=n_hidden, n_classes=n_classes,
                              block_b=8, block_k=128)
    out_f32 = jax.block_until_ready(out_f32)
    assert out_f32.shape == (batch, n_classes)
    assert jnp.allclose(out_f32, ref, atol=1e-3, rtol=1e-3), "f32 path mismatch vs reference"

    # Production path: bf16 W1 streaming (default), large default tiles.
    params_bf16 = prepare_params(*raw_params)  # w1_dtype=bfloat16
    out_bf16 = torchic_forward(x, *params_bf16, n_hidden=n_hidden, n_classes=n_classes)
    out_bf16 = jax.block_until_ready(out_bf16)
    assert out_bf16.shape == (batch, n_classes)
    assert jnp.allclose(out_bf16, ref, atol=7.5e-2, rtol=5e-2), "bf16 path mismatch vs reference"

    print("KERNEL_OK")
</pallas_src>

<mosaic_0001>
module attributes {stable_mosaic.version = 11 : i64} {
  func.func @_torchic_kernel(%arg0: i32, %arg1: i32, %arg2: memref<8x128xf32, #tpu.memory_space<vmem>>, %arg3: memref<128x128xf32, #tpu.memory_space<vmem>>, %arg4: memref<1x128xf32, #tpu.memory_space<vmem>>, %arg5: memref<1x128xf32, #tpu.memory_space<vmem>>, %arg6: memref<1x128xf32, #tpu.memory_space<vmem>>, %arg7: memref<128x128xf32, #tpu.memory_space<vmem>>, %arg8: memref<1x128xf32, #tpu.memory_space<vmem>>, %arg9: memref<8x128xf32, #tpu.memory_space<vmem>>, %arg10: memref<8x128xf32, #tpu.memory_space<vmem>>) attributes {dimension_semantics = [#tpu.dimension_semantics<parallel>, #tpu.dimension_semantics<arbitrary>], iteration_bounds = array<i64: 2, 4>, scalar_prefetch = 0 : i64, scratch_operands = 1 : i64, tpu.core_type = #tpu.core_type<tc>, window_params = [{transform_indices = @transform_0, window_bounds = array<i64: 8, 128>}, {transform_indices = @transform_1, window_bounds = array<i64: 128, 128>}, {pipeline_mode = #tpu.pipeline_mode<synchronous>, transform_indices = @transform_2, window_bounds = array<i64: 1, 128>}, {pipeline_mode = #tpu.pipeline_mode<synchronous>, transform_indices = @transform_3, window_bounds = array<i64: 1, 128>}, {pipeline_mode = #tpu.pipeline_mode<synchronous>, transform_indices = @transform_4, window_bounds = array<i64: 1, 128>}, {pipeline_mode = #tpu.pipeline_mode<synchronous>, transform_indices = @transform_5, window_bounds = array<i64: 128, 128>}, {pipeline_mode = #tpu.pipeline_mode<synchronous>, transform_indices = @transform_6, window_bounds = array<i64: 1, 128>}, {transform_indices = @transform_7, window_bounds = array<i64: 8, 128>}]} {
    %c0_i32 = arith.constant 0 : i32
    %0 = arith.cmpi eq, %arg1, %c0_i32 : i32
    %1 = arith.extui %0 : i1 to i32
    %c0_i32_0 = arith.constant 0 : i32
    %2 = arith.cmpi ne, %1, %c0_i32_0 : i32
    scf.if %2 {
      %cst_9 = arith.constant 0.000000e+00 : f32
      %12 = vector.broadcast %cst_9 : f32 to vector<8x128xf32>
      %c0_10 = arith.constant 0 : index
      %c0_11 = arith.constant 0 : index
      %13 = vector.load %arg10[%c0_10, %c0_11] : memref<8x128xf32, #tpu.memory_space<vmem>>, vector<8x128xf32>
      tpu.vector_store %arg10[%c0_10, %c0_11], %12 {strides = array<i32>} : memref<8x128xf32, #tpu.memory_space<vmem>>, vector<8x128xf32>,
    } else {
    }
    %c0 = arith.constant 0 : index
    %c0_1 = arith.constant 0 : index
    %3 = vector.load %arg10[%c0, %c0_1] : memref<8x128xf32, #tpu.memory_space<vmem>>, vector<8x128xf32>
    %c0_2 = arith.constant 0 : index
    %c0_3 = arith.constant 0 : index
    %4 = vector.load %arg2[%c0_2, %c0_3] : memref<8x128xf32, #tpu.memory_space<vmem>>, vector<8x128xf32>
    %c0_4 = arith.constant 0 : index
    %c0_5 = arith.constant 0 : index
    %5 = vector.load %arg3[%c0_4, %c0_5] : memref<128x128xf32, #tpu.memory_space<vmem>>, vector<128x128xf32>
    %cst = arith.constant dense<0.000000e+00> : vector<8x128xf32>
    %6 = tpu.matmul %4, %5, %cst {dimension_numbers = #tpu.dot_dimension_numbers<[1], [0], [0], [1], [0, 0, 1, 1], [], []>} : vector<8x128xf32>, vector<128x128xf32>, vector<8x128xf32> -> vector<8x128xf32>
    %7 = arith.addf %3, %6 : vector<8x128xf32>
    %c0_6 = arith.constant 0 : index
    %c0_7 = arith.constant 0 : index
    %8 = vector.load %arg10[%c0_6, %c0_7] : memref<8x128xf32, #tpu.memory_space<vmem>>, vector<8x128xf32>
    tpu.vector_store %arg10[%c0_6, %c0_7], %7 {strides = array<i32>} : memref<8x128xf32, #tpu.memory_space<vmem>>, vector<8x128xf32>,
    %c3_i32 = arith.constant 3 : i32
    %9 = arith.cmpi eq, %arg1, %c3_i32 : i32
    %10 = arith.extui %9 : i1 to i32
    %c0_i32_8 = arith.constant 0 : i32
    %11 = arith.cmpi ne, %10, %c0_i32_8 : i32
    scf.if %11 {
      %c0_9 = arith.constant 0 : index
      %c0_10 = arith.constant 0 : index
      %12 = vector.load %arg10[%c0_9, %c0_10] : memref<8x128xf32, #tpu.memory_space<vmem>>, vector<8x128xf32>
      %c0_11 = arith.constant 0 : index
      %c0_12 = arith.constant 0 : index
      %13 = vector.load %arg4[%c0_11, %c0_12] : memref<1x128xf32, #tpu.memory_space<vmem>>, vector<1x128xf32>
      %14 = vector.broadcast %13 : vector<1x128xf32> to vector<8x128xf32>
      %15 = arith.addf %12, %14 : vector<8x128xf32>
      %cst_13 = arith.constant 0.000000e+00 : f32
      %16 = vector.broadcast %cst_13 : f32 to vector<8x128xf32>
      %17 = arith.maximumf %15, %16 : vector<8x128xf32>
      %cst_14 = arith.constant dense<0.000000e+00> : vector<8xf32>
      %18 = vector.multi_reduction <add>, %17, %cst_14 [1] : vector<8x128xf32> to vector<8xf32>
      %19 = vector.shape_cast %18 : vector<8xf32> to vector<8x1xf32>
      %cst_15 = arith.constant 0.0454545468 : f32
      %20 = vector.broadcast %cst_15 : f32 to vector<8x1xf32>
      %21 = arith.mulf %19, %20 : vector<8x1xf32>
      %22 = vector.broadcast %21 : vector<8x1xf32> to vector<8x128xf32>
      %23 = arith.subf %17, %22 : vector<8x128xf32>
      %24 = tpu.iota {dimensions = array<i32: 1>} : vector<8x128xi32>
      %c22_i32 = arith.constant 22 : i32
      %25 = vector.broadcast %c22_i32 : i32 to vector<8x128xi32>
      %26 = arith.cmpi slt, %24, %25 : vector<8x128xi32>
      %cst_16 = arith.constant 0.000000e+00 : f32
      %27 = vector.broadcast %cst_16 : f32 to vector<8x128xf32>
      %28 = arith.select %26, %23, %27 : vector<8x128xi1>, vector<8x128xf32>
      %29 = arith.mulf %28, %28 : vector<8x128xf32>
      %cst_17 = arith.constant dense<0.000000e+00> : vector<8xf32>
      %30 = vector.multi_reduction <add>, %29, %cst_17 [1] : vector<8x128xf32> to vector<8xf32>
      %31 = vector.shape_cast %30 : vector<8xf32> to vector<8x1xf32>
      %cst_18 = arith.constant 0.0454545468 : f32
      %32 = vector.broadcast %cst_18 : f32 to vector<8x1xf32>
      %33 = arith.mulf %31, %32 : vector<8x1xf32>
      %cst_19 = arith.constant 9.99999974E-6 : f32
      %34 = vector.broadcast %cst_19 : f32 to vector<8x1xf32>
      %35 = arith.addf %33, %34 : vector<8x1xf32>
      %36 = math.rsqrt %35 : vector<8x1xf32>
      %37 = vector.broadcast %36 : vector<8x1xf32> to vector<8x128xf32>
      %38 = arith.mulf %28, %37 : vector<8x128xf32>
      %c0_20 = arith.constant 0 : index
      %c0_21 = arith.constant 0 : index
      %39 = vector.load %arg5[%c0_20, %c0_21] : memref<1x128xf32, #tpu.memory_space<vmem>>, vector<1x128xf32>
      %40 = vector.broadcast %39 : vector<1x128xf32> to vector<8x128xf32>
      %41 = arith.mulf %38, %40 : vector<8x128xf32>
      %c0_22 = arith.constant 0 : index
      %c0_23 = arith.constant 0 : index
      %42 = vector.load %arg6[%c0_22, %c0_23] : memref<1x128xf32, #tpu.memory_space<vmem>>, vector<1x128xf32>
      %43 = vector.broadcast %42 : vector<1x128xf32> to vector<8x128xf32>
      %44 = arith.addf %41, %43 : vector<8x128xf32>
      %c0_24 = arith.constant 0 : index
      %c0_25 = arith.constant 0 : index
      %45 = vector.load %arg7[%c0_24, %c0_25] : memref<128x128xf32, #tpu.memory_space<vmem>>, vector<128x128xf32>
      %cst_26 = arith.constant dense<0.000000e+00> : vector<8x128xf32>
      %46 = tpu.matmul %44, %45, %cst_26 {dimension_numbers = #tpu.dot_dimension_numbers<[1], [0], [0], [1], [0, 0, 1, 1], [], []>} : vector<8x128xf32>, vector<128x128xf32>, vector<8x128xf32> -> vector<8x128xf32>
      %c0_27 = arith.constant 0 : index
      %c0_28 = arith.constant 0 : index
      %47 = vector.load %arg8[%c0_27, %c0_28] : memref<1x128xf32, #tpu.memory_space<vmem>>, vector<1x128xf32>
      %48 = vector.broadcast %47 : vector<1x128xf32> to vector<8x128xf32>
      %49 = arith.addf %46, %48 : vector<8x128xf32>
      %c0_29 = arith.constant 0 : index
      %c0_30 = arith.constant 0 : index
      %50 = vector.load %arg9[%c0_29, %c0_30] : memref<8x128xf32, #tpu.memory_space<vmem>>, vector<8x128xf32>
      tpu.vector_store %arg9[%c0_29, %c0_30], %49 {strides = array<i32>} : memref<8x128xf32, #tpu.memory_space<vmem>>, vector<8x128xf32>,
    } else {
    }
    return
  }
  func.func @transform_0(%arg0: i32, %arg1: i32) -> (i32, i32) {
    %c0_i32 = arith.constant 0 : i32
    return %arg0, %arg1 : i32, i32
  }
  func.func @transform_1(%arg0: i32, %arg1: i32) -> (i32, i32) {
    %c0_i32 = arith.constant 0 : i32
    %c0_i32_0 = arith.constant 0 : i32
    return %arg1, %c0_i32 : i32, i32
  }
  func.func @transform_2(%arg0: i32, %arg1: i32) -> (i32, i32) {
    %c0_i32 = arith.constant 0 : i32
    %c0_i32_0 = arith.constant 0 : i32
    %c0_i32_1 = arith.constant 0 : i32
    return %c0_i32, %c0_i32_0 : i32, i32
  }
  func.func @transform_3(%arg0: i32, %arg1: i32) -> (i32, i32) {
    %c0_i32 = arith.constant 0 : i32
    %c0_i32_0 = arith.constant 0 : i32
    %c0_i32_1 = arith.constant 0 : i32
    return %c0_i32, %c0_i32_0 : i32, i32
  }
  func.func @transform_4(%arg0: i32, %arg1: i32) -> (i32, i32) {
    %c0_i32 = arith.constant 0 : i32
    %c0_i32_0 = arith.constant 0 : i32
    %c0_i32_1 = arith.constant 0 : i32
    return %c0_i32, %c0_i32_0 : i32, i32
  }
  func.func @transform_5(%arg0: i32, %arg1: i32) -> (i32, i32) {
    %c0_i32 = arith.constant 0 : i32
    %c0_i32_0 = arith.constant 0 : i32
    %c0_i32_1 = arith.constant 0 : i32
    return %c0_i32, %c0_i32_0 : i32, i32
  }
  func.func @transform_6(%arg0: i32, %arg1: i32) -> (i32, i32) {
    %c0_i32 = arith.constant 0 : i32
    %c0_i32_0 = arith.constant 0 : i32
    %c0_i32_1 = arith.constant 0 : i32
    return %c0_i32, %c0_i32_0 : i32, i32
  }
  func.func @transform_7(%arg0: i32, %arg1: i32) -> (i32, i32) {
    %c0_i32 = arith.constant 0 : i32
    %c0_i32_0 = arith.constant 0 : i32
    return %arg0, %c0_i32 : i32, i32
  }
}

</mosaic_0001>

<llo_original>
// kernel: torchic_forward.1
$region0: #{torchic_forward.1}
  #allocation0 [shape = 'u32[]', space=smem, size = 0x4, offset = 0x4, fixed_abs, tag = 'smem constant byte address 0x4 - core index']
  #allocation1 [shape = 'u32[144,128]{1,0:T(1,128)}', space=vmem, size = 0x12000, scoped, tag = 'internal scratch']
  #allocation2 [shape = 'f32[8,128]{1,0:T(8,128)}', space=vmem, size = 0x1000, scoped, tag = 'scratch operand']
  %s0 = inlined_call_operand.vmem [shape: f32[16,512], index: 0, kind: input, shape index: {}]
  %s1 = inlined_call_operand.hbm [shape: f32[512,128], index: 1, kind: input, shape index: {}]
  %s2 = inlined_call_operand.vmem [shape: f32[1,128], index: 2, kind: input, shape index: {}]
  %s3 = inlined_call_operand.vmem [shape: f32[1,128], index: 3, kind: input, shape index: {}]
  %s4 = inlined_call_operand.vmem [shape: f32[1,128], index: 4, kind: input, shape index: {}]
  %s5 = inlined_call_operand.vmem [shape: f32[128,128], index: 5, kind: input, shape index: {}]
  %s6 = inlined_call_operand.vmem [shape: f32[1,128], index: 6, kind: input, shape index: {}]
  %s7 = inlined_call_operand.vmem [shape: f32[16,128], index: 7, kind: output, shape index: {}]
  %s8 = sld [smem:[#allocation0]]
  $region73: #{torchic_forward.1} parent=0
    _
  %s10 = ssub.s32 1, %s8
  %s11 = scalar_select 0, %s10, %s8
  $region1: #{torchic_forward.1} parent=0
    #allocation3 [shape = 'u8[131072]{0}', space=vmem, size = 0x20000, scoped, tag = 'input window, operand 1']
    #allocation4 [shape = 's32[2]{0}', space=sflag, size = 0x8, scoped, tag = 'scoped memory for torchic_forward.1']
    %12 = vsyncpa [#allocation4], 0
    %s13 = scalar_lea.sflag [#allocation4], 1
    %14 = vsyncpa %s13, 0
    loop: start=0, step=1, limit=10
    $region2: #{torchic_forward.1} parent=1 // loop_pre_header
      _
    $region3: #{torchic_forward.1} parent=1 // loop_header
      %s16 = sphi 0, %s20
      %p17 = scmp.ge.s32.totalorder %s16, 10
      %s23 = sphi 0, %s35
      %s24 = sphi 0, %s31
      %s25 = sphi 0, %s23
      %s26 = sphi 0, %s24
      %s27 = sphi 0, %s25
      %s28 = sphi 0, %s26
      %s40 = sphi 0, %s42
      %s43 = sphi 0, %s40
      %s44 = sphi 0, %s43
      %s60 = sphi 0, %s44
      %s66 = sphi 0, %s68
      %s69 = sphi 0, %s66
      %s70 = sphi 0, %s69
      %s86 = sphi 0, %s70
      %s90 = sphi 0, %s90
      %s92 = sphi 0, %s90
      %s93 = sphi 0, %s92
      %s107 = sphi 0, %s93
      %s111 = sphi 0, %s111
      %s113 = sphi 0, %s111
      %s114 = sphi 0, %s113
      %s128 = sphi 0, %s114
      %s132 = sphi 0, %s132
      %s134 = sphi 0, %s132
      %s135 = sphi 0, %s134
      %s149 = sphi 0, %s135
      %s153 = sphi 0, %s153
      %s155 = sphi 0, %s153
      %s156 = sphi 0, %s155
      %s170 = sphi 0, %s156
      %s174 = sphi 0, %s174
      %s176 = sphi 0, %s174
      %s177 = sphi 0, %s176
      %s191 = sphi 0, %s177
      %s197 = sphi 0, %s199
      %s200 = sphi 0, %s197
      %s201 = sphi 0, %s200
      %s217 = sphi 0, %s201
    $region4: #{torchic_forward.1} parent=1 // loop_header_branch
      %19 = sbr.rel (%p17) target = $region8
    $region5: #{torchic_forward.1} parent=1 // loop_body
      %s21 = ssub.s32 %s16, 1
      %s22 = ssub.s32 %s16, 2
      %s29 = sadd.s32 1, %s24
      %p30 = scmp.ge.s32.totalorder %s29, 4
      %s31 = scalar_select %p30, 0, %s29
      %s32 = sadd.s32 1, %s23
      %s33 = scalar_select %p30, %s32, %s23
      %p34 = scmp.ge.s32.totalorder %s33, 2
      %s35 = scalar_select %p34, 0, %s33
      %s36 = ssub.s32 %s23, %s35
      %s37 = ssub.s32 %s24, %s31
      %s38 = sor.u32 %s36, %s37
      %p39 = scmp.eq.s32.totalorder %s38, 0
      %s41 = sadd.s32 %s40, 1
      %s42 = scalar_select %p39, %s40, %s41
      %p45 = pneg %p39
      %p46 = scmp.eq.s32.totalorder %s16, 7
      %p47 = por %p45, %p46
      %p48 = scmp.ne.s32.totalorder %s40, %s43
      %p49 = scmp.eq.s32.totalorder %s16, 0
      %p50 = por %p48, %p49
      %p51 = scmp.ne.s32.totalorder %s40, %s43
      %p52 = scmp.eq.s32.totalorder %s21, 7
      %p53 = por %p51, %p52
      %p54 = scmp.ne.s32.totalorder %s43, %s44
      %p55 = scmp.eq.s32.totalorder %s21, 0
      %p56 = por %p54, %p55
      %p57 = scmp.ne.s32.totalorder %s43, %s44
      %p58 = scmp.eq.s32.totalorder %s22, 7
      %p59 = por %p57, %p58
      %p61 = scmp.ne.s32.totalorder %s44, %s60
      %p62 = scmp.eq.s32.totalorder %s22, 0
      %p63 = por %p61, %p62
      %s64 = ssub.s32 %s24, %s31
      %p65 = scmp.eq.s32.totalorder %s64, 0
      %s67 = sadd.s32 %s66, 1
      %s68 = scalar_select %p65, %s66, %s67
      %p71 = pneg %p65
      %p72 = scmp.eq.s32.totalorder %s16, 7
      %p73 = por %p71, %p72
      %p74 = scmp.ne.s32.totalorder %s66, %s69
      %p75 = scmp.eq.s32.totalorder %s16, 0
      %p76 = por %p74, %p75
      %p77 = scmp.ne.s32.totalorder %s66, %s69
      %p78 = scmp.eq.s32.totalorder %s21, 7
      %p79 = por %p77, %p78
      %p80 = scmp.ne.s32.totalorder %s69, %s70
      %p81 = scmp.eq.s32.totalorder %s21, 0
      %p82 = por %p80, %p81
      %p83 = scmp.ne.s32.totalorder %s69, %s70
      %p84 = scmp.eq.s32.totalorder %s22, 7
      %p85 = por %p83, %p84
      %p87 = scmp.ne.s32.totalorder %s70, %s86
      %p88 = scmp.eq.s32.totalorder %s22, 0
      %p89 = por %p87, %p88
      %s91 = sadd.s32 %s90, 1
      %p94 = scmp.eq.s32.totalorder %s16, 7
      %p95 = scmp.ne.s32.totalorder %s90, %s92
      %p96 = scmp.eq.s32.totalorder %s16, 0
      %p97 = por %p95, %p96
      %p98 = scmp.ne.s32.totalorder %s90, %s92
      %p99 = scmp.eq.s32.totalorder %s21, 7
      %p100 = por %p98, %p99
      %p101 = scmp.ne.s32.totalorder %s92, %s93
      %p102 = scmp.eq.s32.totalorder %s21, 0
      %p103 = por %p101, %p102
      %p104 = scmp.ne.s32.totalorder %s92, %s93
      %p105 = scmp.eq.s32.totalorder %s22, 7
      %p106 = por %p104, %p105
      %p108 = scmp.ne.s32.totalorder %s93, %s107
      %p109 = scmp.eq.s32.totalorder %s22, 0
      %p110 = por %p108, %p109
      %s112 = sadd.s32 %s111, 1
      %p115 = scmp.eq.s32.totalorder %s16, 7
      %p116 = scmp.ne.s32.totalorder %s111, %s113
      %p117 = scmp.eq.s32.totalorder %s16, 0
      %p118 = por %p116, %p117
      %p119 = scmp.ne.s32.totalorder %s111, %s113
      %p120 = scmp.eq.s32.totalorder %s21, 7
      %p121 = por %p119, %p120
      %p122 = scmp.ne.s32.totalorder %s113, %s114
      %p123 = scmp.eq.s32.totalorder %s21, 0
      %p124 = por %p122, %p123
      %p125 = scmp.ne.s32.totalorder %s113, %s114
      %p126 = scmp.eq.s32.totalorder %s22, 7
      %p127 = por %p125, %p126
      %p129 = scmp.ne.s32.totalorder %s114, %s128
      %p130 = scmp.eq.s32.totalorder %s22, 0
      %p131 = por %p129, %p130
      %s133 = sadd.s32 %s132, 1
      %p136 = scmp.eq.s32.totalorder %s16, 7
      %p137 = scmp.ne.s32.totalorder %s132, %s134
      %p138 = scmp.eq.s32.totalorder %s16, 0
      %p139 = por %p137, %p138
      %p140 = scmp.ne.s32.totalorder %s132, %s134
      %p141 = scmp.eq.s32.totalorder %s21, 7
      %p142 = por %p140, %p141
      %p143 = scmp.ne.s32.totalorder %s134, %s135
      %p144 = scmp.eq.s32.totalorder %s21, 0
      %p145 = por %p143, %p144
      %p146 = scmp.ne.s32.totalorder %s134, %s135
      %p147 = scmp.eq.s32.totalorder %s22, 7
      %p148 = por %p146, %p147
      %p150 = scmp.ne.s32.totalorder %s135, %s149
      %p151 = scmp.eq.s32.totalorder %s22, 0
      %p152 = por %p150, %p151
      %s154 = sadd.s32 %s153, 1
      %p157 = scmp.eq.s32.totalorder %s16, 7
      %p158 = scmp.ne.s32.totalorder %s153, %s155
      %p159 = scmp.eq.s32.totalorder %s16, 0
      %p160 = por %p158, %p159
      %p161 = scmp.ne.s32.totalorder %s153, %s155
      %p162 = scmp.eq.s32.totalorder %s21, 7
      %p163 = por %p161, %p162
      %p164 = scmp.ne.s32.totalorder %s155, %s156
      %p165 = scmp.eq.s32.totalorder %s21, 0
      %p166 = por %p164, %p165
      %p167 = scmp.ne.s32.totalorder %s155, %s156
      %p168 = scmp.eq.s32.totalorder %s22, 7
      %p169 = por %p167, %p168
      %p171 = scmp.ne.s32.totalorder %s156, %s170
      %p172 = scmp.eq.s32.totalorder %s22, 0
      %p173 = por %p171, %p172
      %s175 = sadd.s32 %s174, 1
      %p178 = scmp.eq.s32.totalorder %s16, 7
      %p179 = scmp.ne.s32.totalorder %s174, %s176
      %p180 = scmp.eq.s32.totalorder %s16, 0
      %p181 = por %p179, %p180
      %p182 = scmp.ne.s32.totalorder %s174, %s176
      %p183 = scmp.eq.s32.totalorder %s21, 7
      %p184 = por %p182, %p183
      %p185 = scmp.ne.s32.totalorder %s176, %s177
      %p186 = scmp.eq.s32.totalorder %s21, 0
      %p187 = por %p185, %p186
      %p188 = scmp.ne.s32.totalorder %s176, %s177
      %p189 = scmp.eq.s32.totalorder %s22, 7
      %p190 = por %p188, %p189
      %p192 = scmp.ne.s32.totalorder %s177, %s191
      %p193 = scmp.eq.s32.totalorder %s22, 0
      %p194 = por %p192, %p193
      %s195 = ssub.s32 %s23, %s35
      %p196 = scmp.eq.s32.totalorder %s195, 0
      %s198 = sadd.s32 %s197, 1
      %s199 = scalar_select %p196, %s197, %s198
      %p202 = pneg %p196
      %p203 = scmp.eq.s32.totalorder %s16, 7
      %p204 = por %p202, %p203
      %p205 = scmp.ne.s32.totalorder %s197, %s200
      %p206 = scmp.eq.s32.totalorder %s16, 0
      %p207 = por %p205, %p206
      %p208 = scmp.ne.s32.totalorder %s197, %s200
      %p209 = scmp.eq.s32.totalorder %s21, 7
      %p210 = por %p208, %p209
      %p211 = scmp.ne.s32.totalorder %s200, %s201
      %p212 = scmp.eq.s32.totalorder %s21, 0
      %p213 = por %p211, %p212
      %p214 = scmp.ne.s32.totalorder %s200, %s201
      %p215 = scmp.eq.s32.totalorder %s22, 7
      %p216 = por %p214, %p215
      %p218 = scmp.ne.s32.totalorder %s201, %s217
      %p219 = scmp.eq.s32.totalorder %s22, 0
      %p220 = por %p218, %p219
      %p221 = scmp.le.s32.totalorder 1, %s16
      %p222 = scmp.lt.s32.totalorder %s16, 9
      %p223 = pnand %p221, %p222
      %p224 = pneg %p223
      // Predicated region
      $region9: #{torchic_forward.1} parent=5 // pred_check
        _
      $region10: #{torchic_forward.1} parent=5 // pred_check_branch
        %226 = sbr.rel (%p223) target = $region12
      $region11: #{torchic_forward.1} parent=5 // pred_region
        %s227 = ssub.s32 %s16, 1
        // Predicated region
        $region13: #{torchic_forward.1} parent=11 // pred_check
          %p228 = pneg %p103
        $region14: #{torchic_forward.1} parent=11 // pred_check_branch
          %230 = sbr.rel (%p228) target = $region16
        $region15: #{torchic_forward.1} parent=11 // pred_region
          _
        $region16: #{torchic_forward.1} parent=11 // pred_fallthru
          _
        // Predicated region
        $region17: #{torchic_forward.1} parent=11 // pred_check
          %p231 = pneg %p124
        $region18: #{torchic_forward.1} parent=11 // pred_check_branch
          %233 = sbr.rel (%p231) target = $region20
        $region19: #{torchic_forward.1} parent=11 // pred_region
          _
        $region20: #{torchic_forward.1} parent=11 // pred_fallthru
          _
        // Predicated region
        $region21: #{torchic_forward.1} parent=11 // pred_check
          %p234 = pneg %p145
        $region22: #{torchic_forward.1} parent=11 // pred_check_branch
          %236 = sbr.rel (%p234) target = $region24
        $region23: #{torchic_forward.1} parent=11 // pred_region
          _
        $region24: #{torchic_forward.1} parent=11 // pred_fallthru
          _
        // Predicated region
        $region25: #{torchic_forward.1} parent=11 // pred_check
          %p237 = pneg %p166
        $region26: #{torchic_forward.1} parent=11 // pred_check_branch
          %239 = sbr.rel (%p237) target = $region28
        $region27: #{torchic_forward.1} parent=11 // pred_region
          _
        $region28: #{torchic_forward.1} parent=11 // pred_fallthru
          _
        // Predicated region
        $region29: #{torchic_forward.1} parent=11 // pred_check
          %p240 = pneg %p187
        $region30: #{torchic_forward.1} parent=11 // pred_check_branch
          %242 = sbr.rel (%p240) target = $region32
        $region31: #{torchic_forward.1} parent=11 // pred_region
          _
        $region32: #{torchic_forward.1} parent=11 // pred_fallthru
          _
      $region12: #{torchic_forward.1} parent=5 // pred_fallthru
        _
      %p243 = scmp.lt.s32.totalorder %s16, 8
      // Predicated region
      $region33: #{torchic_forward.1} parent=5 // pred_check
        %p244 = pneg %p243
      $region34: #{torchic_forward.1} parent=5 // pred_check_branch
        %246 = sbr.rel (%p244) target = $region36
      $region35: #{torchic_forward.1} parent=5 // pred_region
        // Predicated region
        $region37: #{torchic_forward.1} parent=35 // pred_check
          %p247 = pneg %p50
        $region38: #{torchic_forward.1} parent=35 // pred_check_branch
          %249 = sbr.rel (%p247) target = $region40
        $region39: #{torchic_forward.1} parent=35 // pred_region
          %p250 = scmp.lt.s32.totalorder %s23, 1
          %s251 = scalar_select %p250, %s23, 1
          %p252 = scmp.lt.s32.totalorder %s24, 3
          %s253 = scalar_select %p252, %s24, 3
          %s254 = smul.addr %s251, 4
          %s255 = sadd.s32 %s253, %s254
          %s256 = smul.addr %s255, 8
          %s257 = scalar_lea.vmem %s0, %s256
        $region40: #{torchic_forward.1} parent=35 // pred_fallthru
          _
        // Predicated region
        $region41: #{torchic_forward.1} parent=35 // pred_check
          %p258 = pneg %p76
        $region42: #{torchic_forward.1} parent=35 // pred_check_branch
          %260 = sbr.rel (%p258) target = $region44
        $region43: #{torchic_forward.1} parent=35 // pred_region
          %s261 = sand.u32 %s66, 1
          %s262 = scalar_lea.sflag [#allocation4], %s261
          %s263 = sand.u32 %s66, 1
          %s264 = smul.addr %s263, 128
          %s265 = scalar_lea.vmem [#allocation3], %s264
          %s266 = smul.u32 16, %s24
          %s268 = ssub.s32 2048, 2048
          %269 = vsyncadd %s262, %s268
          %s270 = smul.addr %s266, 128
          %s271 = scalar_lea.hbm %s1, %s270
          %s272 = sshll.u32 %s265, 4
          %s273 = int_to_ptr.vmem [resolvable:$true] %s272
          %278 = dma.hbm_to_vmem [thread:$0]  %s271, 2048, %s273, %s262, 128, 128, 8
        $region44: #{torchic_forward.1} parent=35 // pred_fallthru
          _
      $region36: #{torchic_forward.1} parent=5 // pred_fallthru
        _
      %p279 = scmp.le.s32.totalorder 1, %s16
      %p280 = scmp.lt.s32.totalorder %s16, 9
      %p281 = pnand %p279, %p280
      %p282 = pneg %p281
      // Predicated region
      $region45: #{torchic_forward.1} parent=5 // pred_check
        _
      $region46: #{torchic_forward.1} parent=5 // pred_check_branch
        %284 = sbr.rel (%p281) target = $region48
      $region47: #{torchic_forward.1} parent=5 // pred_region
        %s285 = ssub.s32 %s16, 1
        %s286 = sand.u32 %s69, 1
        %s287 = scalar_lea.sflag [#allocation4], %s286
        %s288 = sand.u32 %s69, 1
        %s289 = smul.addr %s288, 128
        %s290 = scalar_lea.vmem [#allocation3], %s289
        // Predicated region
        $region49: #{torchic_forward.1} parent=47 // pred_check
          %p291 = pneg %p82
        $region50: #{torchic_forward.1} parent=47 // pred_check_branch
          %293 = sbr.rel (%p291) target = $region52
        $region51: #{torchic_forward.1} parent=47 // pred_region
          %294 = dma.done %s287, 2048
        $region52: #{torchic_forward.1} parent=47 // pred_fallthru
          _
        %p295 = scmp.lt.s32.totalorder %s25, 1
        %s296 = scalar_select %p295, %s25, 1
        %p297 = scmp.lt.s32.totalorder %s26, 3
        %s298 = scalar_select %p297, %s26, 3
        %s299 = smul.addr %s296, 4
        %s300 = sadd.s32 %s298, %s299
        %s301 = smul.addr %s300, 8
        %s302 = scalar_lea.vmem %s0, %s301
        %p303 = pneg %p56
        %p304 = pneg %p53
        %s305 = sand.u32 %s69, 1
        %s306 = scalar_lea.sflag [#allocation4], %s305
        %s307 = sand.u32 %s69, 1
        %s308 = smul.addr %s307, 128
        %s309 = scalar_lea.vmem [#allocation3], %s308
        %p310 = pneg %p82
        %p311 = pneg %p79
        %p312 = pneg %p103
        %p313 = pneg %p100
        %p314 = pneg %p124
        %p315 = pneg %p121
        %p316 = pneg %p145
        %p317 = pneg %p142
        %p318 = pneg %p166
        %p319 = pneg %p163
        %p320 = pneg %p187
        %p321 = pneg %p184
        %p322 = pneg %p213
        %p323 = pneg %p210
        %p324 = scmp.lt.s32.totalorder %s25, 1
        %s325 = scalar_select %p324, %s25, 1
        %s326 = smul.addr %s325, 8
        %s327 = scalar_lea.vmem %s7, %s326
        %p328 = scmp.lt.s32.totalorder %s25, 1
        %s329 = scalar_select %p328, %s25, 1
        %p330 = scmp.lt.s32.totalorder %s26, 3
        %s331 = scalar_select %p330, %s26, 3
        %s332 = smul.addr %s329, 4
        %s333 = sadd.s32 %s331, %s332
        %s334 = smul.addr %s333, 8
        %s335 = scalar_lea.vmem %s0, %s334
        %s336 = smul.u32 16, %s26
        %p337 = scmp.lt.s32.totalorder %s25, 1
        %s338 = scalar_select %p337, %s25, 1
        %s339 = smul.addr %s338, 8
        %s340 = scalar_lea.vmem %s7, %s339
        %p341 = scmp.eq.s32.totalorder %s26, 0
        // Predicated region
        $region53: #{torchic_forward.1} parent=47 // pred_check
          %p342 = pneg %p341
        $region54: #{torchic_forward.1} parent=47 // pred_check_branch
          %344 = sbr.rel (%p342) target = $region56
        $region55: #{torchic_forward.1} parent=47 // pred_region
          %345 = vst [vmem:[#allocation2] sm:$0xff] 0.0
        $region56: #{torchic_forward.1} parent=47 // pred_fallthru
          _
        %v346 = vld [vmem:[#allocation2] sm:$0xff]
        %v347 = vld [vmem:[%s335] sm:$0xff]
        %v348 = vld [vmem:[%s290] sm:$0xff]
        %v349 = vld [vmem:[%s290 + $0x8] sm:$0xff]
        %v350 = vld [vmem:[%s290 + $0x10] sm:$0xff]
        %v351 = vld [vmem:[%s290 + $0x18] sm:$0xff]
        %v352 = vld [vmem:[%s290 + $0x20] sm:$0xff]
        %v353 = vld [vmem:[%s290 + $0x28] sm:$0xff]
        %v354 = vld [vmem:[%s290 + $0x30] sm:$0xff]
        %v355 = vld [vmem:[%s290 + $0x38] sm:$0xff]
        %v356 = vld [vmem:[%s290 + $0x40] sm:$0xff]
        %v357 = vld [vmem:[%s290 + $0x48] sm:$0xff]
        %v358 = vld [vmem:[%s290 + $0x50] sm:$0xff]
        %v359 = vld [vmem:[%s290 + $0x58] sm:$0xff]
        %v360 = vld [vmem:[%s290 + $0x60] sm:$0xff]
        %v361 = vld [vmem:[%s290 + $0x68] sm:$0xff]
        %v362 = vld [vmem:[%s290 + $0x70] sm:$0xff]
        %v363 = vld [vmem:[%s290 + $0x78] sm:$0xff]
        %364 = vmatprep.subr.mxu0 0.0
        %365 = vmatpush1.msra.mxu0 %v363
        %366 = vmatprep.subr.mxu0 0.0
        %367 = vmatpush1.msra.mxu0 %v362
        %368 = vmatprep.subr.mxu0 0.0
        %369 = vmatpush1.msra.mxu0 %v361
        %370 = vmatprep.subr.mxu0 0.0
        %371 = vmatpush1.msra.mxu0 %v360
        %372 = vmatprep.subr.mxu0 0.0
        %373 = vmatpush1.msra.mxu0 %v359
        %374 = vmatprep.subr.mxu0 0.0
        %375 = vmatpush1.msra.mxu0 %v358
        %376 = vmatprep.subr.mxu0 0.0
        %377 = vmatpush1.msra.mxu0 %v357
        %378 = vmatprep.subr.mxu0 0.0
        %379 = vmatpush1.msra.mxu0 %v356
        %380 = vmatprep.subr.mxu0 0.0
        %381 = vmatpush1.msra.mxu0 %v355
        %382 = vmatprep.subr.mxu0 0.0
        %383 = vmatpush1.msra.mxu0 %v354
        %384 = vmatprep.subr.mxu0 0.0
        %385 = vmatpush1.msra.mxu0 %v353
        %386 = vmatprep.subr.mxu0 0.0
        %387 = vmatpush1.msra.mxu0 %v352
        %388 = vmatprep.subr.mxu0 0.0
        %389 = vmatpush1.msra.mxu0 %v351
        %390 = vmatprep.subr.mxu0 0.0
        %391 = vmatpush1.msra.mxu0 %v350
        %392 = vmatprep.subr.mxu0 0.0
        %393 = vmatpush1.msra.mxu0 %v349
        %394 = vmatprep.subr.mxu0 0.0
        %395 = vmatpush1.msra.mxu0 %v348
        %396 = vmatprep.subr.mxu0 0.0
        %397 = vmatpush2.msra.mxu0 0.0
        %398 = vmatprep.subr.mxu0 0.0
        %399 = vmatpush2.msra.mxu0 0.0
        %400 = vmatprep.subr.mxu0 0.0
        %401 = vmatpush2.msra.mxu0 0.0
        %402 = vmatprep.subr.mxu0 0.0
        %403 = vmatpush2.msra.mxu0 0.0
        %404 = vmatprep.subr.mxu0 0.0
        %405 = vmatpush2.msra.mxu0 0.0
        %406 = vmatprep.subr.mxu0 0.0
        %407 = vmatpush2.msra.mxu0 0.0
        %408 = vmatprep.subr.mxu0 0.0
        %409 = vmatpush2.msra.mxu0 0.0
        %410 = vmatprep.subr.mxu0 0.0
        %411 = vmatpush2.msra.mxu0 0.0
        %412 = vmatprep.subr.mxu0 0.0
        %413 = vmatpush2.msra.mxu0 0.0
        %414 = vmatprep.subr.mxu0 0.0
        %415 = vmatpush2.msra.mxu0 0.0
        %416 = vmatprep.subr.mxu0 0.0
        %417 = vmatpush2.msra.mxu0 0.0
        %418 = vmatprep.subr.mxu0 0.0
        %419 = vmatpush2.msra.mxu0 0.0
        %420 = vmatprep.subr.mxu0 0.0
        %421 = vmatpush2.msra.mxu0 0.0
        %422 = vmatprep.subr.mxu0 0.0
        %423 = vmatpush2.msra.mxu0 0.0
        %424 = vmatprep.subr.mxu0 0.0
        %425 = vmatpush2.msra.mxu0 0.0
        %426 = vmatprep.subr.mxu0 0.0
        %427 = vmatpush2.msra.mxu0 0.0
        %428 = vmatprep.mubr.f32.mxu0 0.0
        %429 = vmatmul.mubr.f32.gmra.mxu0 %v347
        %v430 = vpop.f32.mrf.mxu0
        %v431 = vadd.f32 0.0, %v430
        %v432 = vpop.f32.mrf.mxu0
        %433 = vdwg.mxu0
        %v434 = vadd.f32 %v346, %v431
        %435 = vst [vmem:[#allocation2] sm:$0xff] %v434
        %p436 = scmp.eq.s32.totalorder %s26, 3
        // Predicated region
        $region57: #{torchic_forward.1} parent=47 // pred_check
          %p437 = pneg %p436
        $region58: #{torchic_forward.1} parent=47 // pred_check_branch
          %439 = sbr.rel (%p437) target = $region60
        $region59: #{torchic_forward.1} parent=47 // pred_region
          %v440 = vld [vmem:[#allocation2] sm:$0xff]
          %v441 = vld [vmem:[%s2] sm:$0x1]
          %v443 = vlaneseq
          %v444 = vshrl.u32 %v443, 7
          %v445 = vsub.s32 0, %v444
          %v446 = vrot.slane %v441, %v445
          %v448 = vadd.f32 %v440, %v446
          %v449 = vmax.f32 %v448, 0.0
          %450 = vadd.xlane.f32.xlu0 %v449
          %v451 = vpop.xlane.xlu0 %450
          %v452 = vmul.f32 %v451, 0.045454547
          %v453 = vsub.f32 %v449, %v452
          %v454 = vlaneseq
          %v455 = vand.u32 %v454, 127
          %vm456 = vcmp.lt.s32.totalorder %v455, 22
          %v457 = vsel %vm456, %v453, 0.0
          %v458 = vmul.f32 %v457, %v457
          %459 = vadd.xlane.f32.xlu0 %v458
          %v460 = vpop.xlane.xlu0 %459
          %v461 = vmul.f32 %v460, 0.045454547
          %v462 = vadd.f32 %v461, 1e-05
          %v463 = vrsqrt.pop %v462
          %v464 = vmul.f32 %v457, %v463
          %v465 = vld [vmem:[%s3] sm:$0x1]
          %v467 = vlaneseq
          %v468 = vshrl.u32 %v467, 7
          %v469 = vsub.s32 0, %v468
          %v470 = vrot.slane %v465, %v469
          %v472 = vmul.f32 %v464, %v470
          %v473 = vld [vmem:[%s4] sm:$0x1]
          %v475 = vlaneseq
          %v476 = vshrl.u32 %v475, 7
          %v477 = vsub.s32 0, %v476
          %v478 = vrot.slane %v473, %v477
          %v480 = vadd.f32 %v472, %v478
          %v481 = vld [vmem:[%s5] sm:$0xff]
          %v482 = vld [vmem:[%s5 + $0x8] sm:$0xff]
          %v483 = vld [vmem:[%s5 + $0x10] sm:$0xff]
          %v484 = vld [vmem:[%s5 + $0x18] sm:$0xff]
          %v485 = vld [vmem:[%s5 + $0x20] sm:$0xff]
          %v486 = vld [vmem:[%s5 + $0x28] sm:$0xff]
          %v487 = vld [vmem:[%s5 + $0x30] sm:$0xff]
          %v488 = vld [vmem:[%s5 + $0x38] sm:$0xff]
          %v489 = vld [vmem:[%s5 + $0x40] sm:$0xff]
          %v490 = vld [vmem:[%s5 + $0x48] sm:$0xff]
          %v491 = vld [vmem:[%s5 + $0x50] sm:$0xff]
          %v492 = vld [vmem:[%s5 + $0x58] sm:$0xff]
          %v493 = vld [vmem:[%s5 + $0x60] sm:$0xff]
          %v494 = vld [vmem:[%s5 + $0x68] sm:$0xff]
          %v495 = vld [vmem:[%s5 + $0x70] sm:$0xff]
          %v496 = vld [vmem:[%s5 + $0x78] sm:$0xff]
          %v497 = vld [vmem:[%s6] sm:$0x1]
          %v499 = vlaneseq
          %v500 = vshrl.u32 %v499, 7
          %v501 = vsub.s32 0, %v500
          %v502 = vrot.slane %v497, %v501
          %504 = vmatprep.subr.mxu0 0.0
          %505 = vmatpush1.msra.mxu0 %v496
          %506 = vmatprep.subr.mxu0 0.0
          %507 = vmatpush1.msra.mxu0 %v495
          %508 = vmatprep.subr.mxu0 0.0
          %509 = vmatpush1.msra.mxu0 %v494
          %510 = vmatprep.subr.mxu0 0.0
          %511 = vmatpush1.msra.mxu0 %v493
          %512 = vmatprep.subr.mxu0 0.0
          %513 = vmatpush1.msra.mxu0 %v492
          %514 = vmatprep.subr.mxu0 0.0
          %515 = vmatpush1.msra.mxu0 %v491
          %516 = vmatprep.subr.mxu0 0.0
          %517 = vmatpush1.msra.mxu0 %v490
          %518 = vmatprep.subr.mxu0 0.0
          %519 = vmatpush1.msra.mxu0 %v489
          %520 = vmatprep.subr.mxu0 0.0
          %521 = vmatpush1.msra.mxu0 %v488
          %522 = vmatprep.subr.mxu0 0.0
          %523 = vmatpush1.msra.mxu0 %v487
          %524 = vmatprep.subr.mxu0 0.0
          %525 = vmatpush1.msra.mxu0 %v486
          %526 = vmatprep.subr.mxu0 0.0
          %527 = vmatpush1.msra.mxu0 %v485
          %528 = vmatprep.subr.mxu0 0.0
          %529 = vmatpush1.msra.mxu0 %v484
          %530 = vmatprep.subr.mxu0 0.0
          %531 = vmatpush1.msra.mxu0 %v483
          %532 = vmatprep.subr.mxu0 0.0
          %533 = vmatpush1.msra.mxu0 %v482
          %534 = vmatprep.subr.mxu0 0.0
          %535 = vmatpush1.msra.mxu0 %v481
          %536 = vmatprep.subr.mxu0 0.0
          %537 = vmatpush2.msra.mxu0 0.0
          %538 = vmatprep.subr.mxu0 0.0
          %539 = vmatpush2.msra.mxu0 0.0
          %540 = vmatprep.subr.mxu0 0.0
          %541 = vmatpush2.msra.mxu0 0.0
          %542 = vmatprep.subr.mxu0 0.0
          %543 = vmatpush2.msra.mxu0 0.0
          %544 = vmatprep.subr.mxu0 0.0
          %545 = vmatpush2.msra.mxu0 0.0
          %546 = vmatprep.subr.mxu0 0.0
          %547 = vmatpush2.msra.mxu0 0.0
          %548 = vmatprep.subr.mxu0 0.0
          %549 = vmatpush2.msra.mxu0 0.0
          %550 = vmatprep.subr.mxu0 0.0
          %551 = vmatpush2.msra.mxu0 0.0
          %552 = vmatprep.subr.mxu0 0.0
          %553 = vmatpush2.msra.mxu0 0.0
          %554 = vmatprep.subr.mxu0 0.0
          %555 = vmatpush2.msra.mxu0 0.0
          %556 = vmatprep.subr.mxu0 0.0
          %557 = vmatpush2.msra.mxu0 0.0
          %558 = vmatprep.subr.mxu0 0.0
          %559 = vmatpush2.msra.mxu0 0.0
          %560 = vmatprep.subr.mxu0 0.0
          %561 = vmatpush2.msra.mxu0 0.0
          %562 = vmatprep.subr.mxu0 0.0
          %563 = vmatpush2.msra.mxu0 0.0
          %564 = vmatprep.subr.mxu0 0.0
          %565 = vmatpush2.msra.mxu0 0.0
          %566 = vmatprep.subr.mxu0 0.0
          %567 = vmatpush2.msra.mxu0 0.0
          %568 = vmatprep.mubr.f32.mxu0 0.0
          %569 = vmatmul.mubr.f32.gmra.mxu0 %v480
          %v570 = vpop.f32.mrf.mxu0
          %v571 = vadd.f32 %v502, %v570
          %v572 = vpop.f32.mrf.mxu0
          %573 = vdwg.mxu0
          %574 = vst [vmem:[%s340] sm:$0xff] %v571
        $region60: #{torchic_forward.1} parent=47 // pred_fallthru
          _
        %p575 = scmp.lt.s32.totalorder %s25, 1
        %s576 = scalar_select %p575, %s25, 1
        %s577 = smul.addr %s576, 8
        %s578 = scalar_lea.vmem %s7, %s577
        // Predicated region
        $region61: #{torchic_forward.1} parent=47 // pred_check
          %p579 = pneg %p210
        $region62: #{torchic_forward.1} parent=47 // pred_check_branch
          %581 = sbr.rel (%p579) target = $region64
        $region63: #{torchic_forward.1} parent=47 // pred_region
          _
        $region64: #{torchic_forward.1} parent=47 // pred_fallthru
          _
      $region48: #{torchic_forward.1} parent=5 // pred_fallthru
        _
      %p582 = scmp.le.s32.totalorder 2, %s16
      // Predicated region
      $region65: #{torchic_forward.1} parent=5 // pred_check
        %p583 = pneg %p582
      $region66: #{torchic_forward.1} parent=5 // pred_check_branch
        %585 = sbr.rel (%p583) target = $region68
      $region67: #{torchic_forward.1} parent=5 // pred_region
        %s586 = ssub.s32 %s16, 2
        // Predicated region
        $region69: #{torchic_forward.1} parent=67 // pred_check
          %p587 = pneg %p216
        $region70: #{torchic_forward.1} parent=67 // pred_check_branch
          %589 = sbr.rel (%p587) target = $region72
        $region71: #{torchic_forward.1} parent=67 // pred_region
          %p590 = scmp.lt.s32.totalorder %s27, 1
          %s591 = scalar_select %p590, %s27, 1
          %s592 = smul.addr %s591, 8
          %s593 = scalar_lea.vmem %s7, %s592
        $region72: #{torchic_forward.1} parent=67 // pred_fallthru
          _
      $region68: #{torchic_forward.1} parent=5 // pred_fallthru
        _
    $region6: #{torchic_forward.1} parent=1 // loop_footer
      %s20 = sadd.s32 1, %s16
    $region7: #{torchic_forward.1} parent=1 // loop_footer_branch
      %15 = sbr.rel target = $region3
    $region8: #{torchic_forward.1} parent=1 // loop_exit
      _
    %594 = vsyncpa [#allocation4], 1
    %s595 = scalar_lea.sflag [#allocation4], 1
    %596 = vsyncpa %s595, 1

</llo_original>
